<compile_context>
chip_gen: v7x
topology: tpu7x:2x2x1
jax: 0.10.0
libtpu: 0.0.40
codegen_flags: <defaults>
</compile_context>

<pallas_src>
import functools

import jax
import jax.numpy as jnp
import numpy as np
from jax.experimental import pallas as pl
from jax.experimental.pallas import tpu as pltpu


def _round_up(x, m):
    return (x + m - 1) // m * m


def _single_buffered_spec(block_shape, index_map):
    """BlockSpec for a block with a constant index map (fetched once).

    Uses pipeline_mode=pl.Buffered(1) to halve its VMEM reservation; falls back
    to a plain (double-buffered) BlockSpec on JAX versions without it.
    """
    buffered = getattr(pl, "Buffered", None)
    if buffered is not None:
        try:
            return pl.BlockSpec(block_shape, index_map,
                                pipeline_mode=buffered(1))
        except Exception:  # pragma: no cover - API drift fallback
            pass
    return pl.BlockSpec(block_shape, index_map)


def _netlayer_kernel(x_ref, w_ref, b_ref, o_ref, *, w0, is_last):
    """Full-K path: one MXU matmul per row tile, f32 accumulation."""
    x = x_ref[...].astype(w_ref.dtype)      # cast activation in-kernel (VPU)
    y = jnp.dot(x, w_ref[...], preferred_element_type=jnp.float32)
    y = y + b_ref[...]                      # (1, out_p) broadcasts over rows
    if not is_last:
        y = jnp.sin(w0 * y)
    o_ref[...] = y.astype(o_ref.dtype)


def _netlayer_ktiled_kernel(x_ref, w_ref, b_ref, o_ref, acc_ref, *, w0, is_last):
    """K-tiled path: accumulate partial matmuls in a f32 VMEM scratch."""
    k = pl.program_id(1)

    @pl.when(k == 0)
    def _():
        acc_ref[...] = jnp.zeros_like(acc_ref)

    x = x_ref[...].astype(w_ref.dtype)
    acc_ref[...] += jnp.dot(x, w_ref[...], preferred_element_type=jnp.float32)

    @pl.when(k == pl.num_programs(1) - 1)
    def _():
        y = acc_ref[...] + b_ref[...]
        if not is_last:
            y = jnp.sin(w0 * y)
        o_ref[...] = y.astype(o_ref.dtype)


def prepare_netlayer_params(w, b, *, compute_dtype=jnp.bfloat16):
    """Pad/cast parameters ONCE at init (not per forward call).

    w: (in_f, out_f) (transposed vs nn.Linear), b: (out_f,).
    Returns (wp, bp, out_f) with wp: (in_f, out_p) in compute_dtype and
    bp: (1, out_p) in float32, where out_p = round_up(out_f, 128) (lane-dense).
    """
    in_f, out_f = w.shape
    out_p = _round_up(out_f, 128)
    wp = jnp.pad(w, ((0, 0), (0, out_p - out_f))).astype(compute_dtype)
    bp = jnp.pad(b, (0, out_p - out_f)).astype(jnp.float32).reshape(1, out_p)
    return wp, bp, out_f


def netlayer_forward(x, wp, bp, *, out_f=None, w0=30.0, is_last=False,
                     out_dtype=None, tm=1024,
                     vmem_budget_bytes=24 * 1024 * 1024):
    """SIREN NetLayer forward.

    x: (..., in_f) activations (any dtype; cast to wp.dtype in-kernel).
    wp, bp: prepared params from prepare_netlayer_params (wp: (in_f, out_p),
    bp: (1, out_p) f32).  Returns (..., out_f).  out_dtype defaults to
    wp.dtype (bf16) for hidden layers and x.dtype for the last layer; pass
    out_dtype=jnp.float32 explicitly if f32 parity with PyTorch is required.
    """
    orig_shape = x.shape
    if x.ndim != 2:
        x = x.reshape(-1, orig_shape[-1])
    N, in_f = x.shape
    assert wp.shape[0] == in_f, "weight must be (in_f, out_p)"
    out_p = wp.shape[1]
    assert bp.shape == (1, out_p)
    out_f = out_p if out_f is None else out_f
    if out_dtype is None:
        out_dtype = x.dtype if is_last else wp.dtype

    x_sz = x.dtype.itemsize
    c_sz = wp.dtype.itemsize
    o_sz = np.dtype(out_dtype).itemsize

    def vmem_bytes(tm_, tk_, nk_):
        # VMEM tiles are lane-padded to 128 / sublane-padded to 8.
        tk_lane = _round_up(tk_, 128)
        tk_sub = _round_up(tk_, 8)
        x_b = 2 * tm_ * tk_lane * x_sz                    # double-buffered x
        o_b = 2 * tm_ * out_p * o_sz                      # double-buffered out
        w_b = (1 if nk_ == 1 else 2) * tk_sub * out_p * c_sz
        b_b = out_p * 4                                   # single-buffered bias
        acc_b = 0 if nk_ == 1 else tm_ * out_p * 4        # f32 accumulator
        return x_b + o_b + w_b + b_b + acc_b

    # Row tile: as big as N / the VMEM budget allow (multiple of 8 sublanes).
    tm = max(8, min(_round_up(tm, 8), _round_up(N, 8)))

    # K tiling only when full-K tiles can't keep a healthy (>=512-ish) row tile
    # under the budget AND in_f splits cleanly into 128-lane chunks; otherwise
    # keep full-K blocks (exact, no masking needed on the reduction axis).
    tk, nk = in_f, 1
    if (in_f % 128 == 0 and in_f > 128
            and vmem_bytes(min(tm, 512), in_f, 1) > vmem_budget_bytes):
        tk = 128
        while (tk * 2 <= in_f and in_f % (tk * 2) == 0
               and vmem_bytes(min(tm, 512), tk * 2,
                              in_f // (tk * 2)) <= vmem_budget_bytes):
            tk *= 2
        nk = in_f // tk

    while tm > 8 and vmem_bytes(tm, tk, nk) > vmem_budget_bytes:
        tm = _round_up(tm // 2, 8)
    # Keep >= 4 row-grid steps (>= 2 per TensorCore on v7x) so each core's
    # DMA/compute pipeline actually overlaps.
    while tm > 8 and pl.cdiv(N, tm) < 4:
        tm = _round_up(tm // 2, 8)
    grid_m = pl.cdiv(N, tm)

    cost = pl.CostEstimate(
        flops=int(2 * N * in_f * out_p),
        transcendentals=0 if is_last else int(N * out_p),
        bytes_accessed=int(N * in_f * x_sz + in_f * out_p * c_sz
                           + out_p * 4 + N * out_p * o_sz),
    )

    if nk == 1:
        kernel = functools.partial(_netlayer_kernel, w0=float(w0),
                                   is_last=bool(is_last))
        grid_spec = pltpu.PrefetchScalarGridSpec(
            num_scalar_prefetch=0,
            grid=(grid_m,),
            in_specs=[
                pl.BlockSpec((tm, in_f), lambda i: (i, 0)),            # x tile
                _single_buffered_spec((in_f, out_p), lambda i: (0, 0)),  # W
                _single_buffered_spec((1, out_p), lambda i: (0, 0)),     # bias
            ],
            out_specs=pl.BlockSpec((tm, out_p), lambda i: (i, 0)),
        )
        dims = ("parallel",)
    else:
        kernel = functools.partial(_netlayer_ktiled_kernel, w0=float(w0),
                                   is_last=bool(is_last))
        grid_spec = pltpu.PrefetchScalarGridSpec(
            num_scalar_prefetch=0,
            grid=(grid_m, nk),
            in_specs=[
                pl.BlockSpec((tm, tk), lambda i, k: (i, k)),           # x tile
                pl.BlockSpec((tk, out_p), lambda i, k: (k, 0)),        # W tile
                _single_buffered_spec((1, out_p), lambda i, k: (0, 0)),  # bias
            ],
            out_specs=pl.BlockSpec((tm, out_p), lambda i, k: (i, 0)),
            scratch_shapes=[pltpu.VMEM((tm, out_p), jnp.float32)],
        )
        dims = ("parallel", "arbitrary")

    out = pl.pallas_call(
        kernel,
        out_shape=jax.ShapeDtypeStruct((N, out_p), out_dtype),
        grid_spec=grid_spec,
        compiler_params=pltpu.CompilerParams(
            dimension_semantics=dims,
            vmem_limit_bytes=int(vmem_budget_bytes + 2 * 1024 * 1024),
        ),
        cost_estimate=cost,
    )(x, wp, bp)

    if out_f != out_p:
        out = out[:, :out_f]
    return out.reshape(*orig_shape[:-1], out_f)


def init_netlayer_params(key, in_f, out_f, *, w0=30.0, is_first=False):
    """Deterministic init matching NetLayer.__init__ / init_weights.

    weight ~ U(-b, b) with b = 1/in_f (first layer) or sqrt(6/in_f)/w0;
    bias keeps the PyTorch nn.Linear default U(-1/sqrt(in_f), 1/sqrt(in_f)).
    Weight is stored transposed: (in_f, out_f).
    """
    kw, kb = jax.random.split(key)
    if is_first:
        bound_w = 1.0 / in_f
    else:
        bound_w = float(np.sqrt(6.0 / in_f)) / w0
    bound_b = 1.0 / float(np.sqrt(in_f))
    w = jax.random.uniform(kw, (in_f, out_f), jnp.float32,
                           minval=-bound_w, maxval=bound_w)
    b = jax.random.uniform(kb, (out_f,), jnp.float32,
                           minval=-bound_b, maxval=bound_b)
    return w, b


if __name__ == "__main__":
    key = jax.random.PRNGKey(0)
    k_x, k_p1, k_p2, k_x3, k_p3 = jax.random.split(key, 5)
    w0 = 30.0

    # Small, awkward shapes to exercise padding/ragged paths:
    # 50 coordinate rows (not a tile multiple), in_f=8, out_f=32 (< 128 lanes).
    N, in_f, out_f = 50, 8, 32
    x = jax.random.normal(k_x, (N, in_f), jnp.float32)
    w1, b1 = init_netlayer_params(k_p1, in_f, out_f, w0=w0, is_first=True)

    # --- f32 streaming path: tight check vs high-precision reference ---
    wp32, bp32, of = prepare_netlayer_params(w1, b1, compute_dtype=jnp.float32)
    out_f32 = jax.block_until_ready(
        netlayer_forward(x, wp32, bp32, out_f=of, w0=w0, is_last=False))
    ref = jnp.sin(w0 * (jnp.dot(x, w1, precision=jax.lax.Precision.HIGHEST) + b1))
    np.testing.assert_allclose(np.asarray(out_f32), np.asarray(ref),
                               rtol=1e-4, atol=1e-4)

    # --- bf16 weights (default): x cast in-kernel, bf16 output tile stores ---
    wp16, bp16, of = prepare_netlayer_params(w1, b1)
    out_bf16 = jax.block_until_ready(
        netlayer_forward(x, wp16, bp16, out_f=of, w0=w0, is_last=False))
    assert out_bf16.dtype == jnp.bfloat16
    xb = x.astype(jnp.bfloat16).astype(jnp.float32)
    wb = w1.astype(jnp.bfloat16).astype(jnp.float32)
    ref_b = jnp.sin(
        w0 * (jnp.dot(xb, wb, precision=jax.lax.Precision.HIGHEST) + b1))
    np.testing.assert_allclose(np.asarray(out_bf16.astype(jnp.float32)),
                               np.asarray(ref_b), rtol=2e-2, atol=2e-2)

    # --- is_last path (no sin), f32 ---
    out_last = jax.block_until_ready(
        netlayer_forward(x, wp32, bp32, out_f=of, w0=w0, is_last=True))
    ref_last = jnp.dot(x, w1, precision=jax.lax.Precision.HIGHEST) + b1
    np.testing.assert_allclose(np.asarray(out_last), np.asarray(ref_last),
                               rtol=1e-4, atol=1e-4)

    # --- chained layer: bf16 activation streamed directly (no wrapper cast) ---
    w2, b2 = init_netlayer_params(k_p2, out_f, 64, w0=w0)
    wp2, bp2, of2 = prepare_netlayer_params(w2, b2)
    out2 = jax.block_until_ready(
        netlayer_forward(out_bf16, wp2, bp2, out_f=of2, w0=w0, is_last=True))
    assert out2.shape == (N, 64)
    assert bool(jnp.all(jnp.isfinite(out2.astype(jnp.float32))))

    # --- K-tiled path (forced via a tiny VMEM budget): ragged rows + 2 K steps
    N3, in3, out3 = 70, 256, 256
    x3 = jax.random.normal(k_x3, (N3, in3), jnp.float32)
    w3, b3 = init_netlayer_params(k_p3, in3, out3, w0=w0)
    wp3, bp3, of3 = prepare_netlayer_params(w3, b3)
    out3_ = jax.block_until_ready(
        netlayer_forward(x3, wp3, bp3, out_f=of3, w0=w0, is_last=False,
                         vmem_budget_bytes=192 * 1024))
    x3b = x3.astype(jnp.bfloat16).astype(jnp.float32)
    w3b = w3.astype(jnp.bfloat16).astype(jnp.float32)
    ref3 = jnp.sin(
        w0 * (jnp.dot(x3b, w3b, precision=jax.lax.Precision.HIGHEST) + b3))
    np.testing.assert_allclose(np.asarray(out3_.astype(jnp.float32)),
                               np.asarray(ref3), rtol=2e-2, atol=2e-2)

    print("KERNEL_OK")
</pallas_src>

<mosaic_0001>
module attributes {stable_mosaic.version = 11 : i64} {
  func.func @_netlayer_kernel(%arg0: i32, %arg1: memref<16x8xf32, #tpu.memory_space<vmem>>, %arg2: memref<8x128xf32, #tpu.memory_space<vmem>>, %arg3: memref<1x128xf32, #tpu.memory_space<vmem>>, %arg4: memref<16x128xf32, #tpu.memory_space<vmem>>) attributes {dimension_semantics = [#tpu.dimension_semantics<parallel>], iteration_bounds = array<i64: 4>, scalar_prefetch = 0 : i64, scratch_operands = 0 : i64, tpu.core_type = #tpu.core_type<tc>, window_params = [{transform_indices = @transform_0, window_bounds = array<i64: 16, 8>}, {pipeline_mode = #tpu.pipeline_mode<synchronous>, transform_indices = @transform_1, window_bounds = array<i64: 8, 128>}, {pipeline_mode = #tpu.pipeline_mode<synchronous>, transform_indices = @transform_2, window_bounds = array<i64: 1, 128>}, {transform_indices = @transform_3, window_bounds = array<i64: 16, 128>}]} {
    %c0 = arith.constant 0 : index
    %c0_0 = arith.constant 0 : index
    %0 = vector.load %arg1[%c0, %c0_0] : memref<16x8xf32, #tpu.memory_space<vmem>>, vector<16x8xf32>
    %c0_1 = arith.constant 0 : index
    %c0_2 = arith.constant 0 : index
    %1 = vector.load %arg2[%c0_1, %c0_2] : memref<8x128xf32, #tpu.memory_space<vmem>>, vector<8x128xf32>
    %cst = arith.constant dense<0.000000e+00> : vector<16x128xf32>
    %2 = tpu.matmul %0, %1, %cst {dimension_numbers = #tpu.dot_dimension_numbers<[1], [0], [0], [1], [0, 0, 1, 1], [], []>} : vector<16x8xf32>, vector<8x128xf32>, vector<16x128xf32> -> vector<16x128xf32>
    %c0_3 = arith.constant 0 : index
    %c0_4 = arith.constant 0 : index
    %3 = vector.load %arg3[%c0_3, %c0_4] : memref<1x128xf32, #tpu.memory_space<vmem>>, vector<1x128xf32>
    %4 = vector.broadcast %3 : vector<1x128xf32> to vector<16x128xf32>
    %5 = arith.addf %2, %4 : vector<16x128xf32>
    %cst_5 = arith.constant 3.000000e+01 : f32
    %6 = vector.broadcast %cst_5 : f32 to vector<16x128xf32>
    %7 = arith.mulf %6, %5 : vector<16x128xf32>
    %8 = math.sin %7 : vector<16x128xf32>
    %c0_6 = arith.constant 0 : index
    %c0_7 = arith.constant 0 : index
    %9 = vector.load %arg4[%c0_6, %c0_7] : memref<16x128xf32, #tpu.memory_space<vmem>>, vector<16x128xf32>
    tpu.vector_store %arg4[%c0_6, %c0_7], %8 {strides = array<i32>} : memref<16x128xf32, #tpu.memory_space<vmem>>, vector<16x128xf32>,
    return
  }
  func.func @transform_0(%arg0: i32) -> (i32, i32) {
    %c0_i32 = arith.constant 0 : i32
    %c0_i32_0 = arith.constant 0 : i32
    return %arg0, %c0_i32 : i32, i32
  }
  func.func @transform_1(%arg0: i32) -> (i32, i32) {
    %c0_i32 = arith.constant 0 : i32
    %c0_i32_0 = arith.constant 0 : i32
    %c0_i32_1 = arith.constant 0 : i32
    return %c0_i32, %c0_i32_0 : i32, i32
  }
  func.func @transform_2(%arg0: i32) -> (i32, i32) {
    %c0_i32 = arith.constant 0 : i32
    %c0_i32_0 = arith.constant 0 : i32
    %c0_i32_1 = arith.constant 0 : i32
    return %c0_i32, %c0_i32_0 : i32, i32
  }
  func.func @transform_3(%arg0: i32) -> (i32, i32) {
    %c0_i32 = arith.constant 0 : i32
    %c0_i32_0 = arith.constant 0 : i32
    return %arg0, %c0_i32 : i32, i32
  }
}

</mosaic_0001>

<llo_original>
// kernel: tpu_custom_call.1
$region0: #{tpu_custom_call.1}
  #allocation0 [shape = 'u32[]', space=smem, size = 0x4, offset = 0x4, fixed_abs, tag = 'smem constant byte address 0x4 - core index']
  #allocation1 [shape = 'u32[144,128]{1,0:T(1,128)}', space=vmem, size = 0x12000, scoped, tag = 'internal scratch']
  %s0 = inlined_call_operand.vmem [shape: f32[50,8], index: 0, kind: input, shape index: {}]
  %s1 = inlined_call_operand.vmem [shape: f32[8,128], index: 1, kind: input, shape index: {}]
  %s2 = inlined_call_operand.vmem [shape: f32[1,128], index: 2, kind: input, shape index: {}]
  %s3 = inlined_call_operand.hbm [shape: f32[50,128], index: 3, kind: output, shape index: {}]
  %s4 = sld [smem:[#allocation0]]
  $region45: #{tpu_custom_call.1} parent=0
    _
  %s6 = ssub.s32 1, %s4
  %s7 = scalar_select 0, %s6, %s4
  $region1: #{tpu_custom_call.1} parent=0
    #allocation2 [shape = 'u8[16384]{0}', space=vmem, size = 0x4000, scoped, tag = 'output window, operand 0']
    #allocation3 [shape = 's32[2]{0}', space=sflag, size = 0x8, scoped, tag = 'scoped memory for tpu_custom_call.1']
    %8 = vsyncpa [#allocation3], 0
    %s9 = scalar_lea.sflag [#allocation3], 1
    %10 = vsyncpa %s9, 0
    loop: start=0, step=1, limit=6
    $region2: #{tpu_custom_call.1} parent=1 // loop_pre_header
      _
    $region3: #{tpu_custom_call.1} parent=1 // loop_header
      %s12 = sphi 0, %s16
      %p13 = scmp.ge.s32.totalorder %s12, 6
      %s22 = sphi 0, %s24
      %s25 = sphi 0, %s22
      %s26 = sphi 0, %s25
      %s42 = sphi 0, %s26
      %s46 = sphi 0, %s46
      %s48 = sphi 0, %s46
      %s49 = sphi 0, %s48
      %s63 = sphi 0, %s49
      %s67 = sphi 0, %s67
      %s69 = sphi 0, %s67
      %s70 = sphi 0, %s69
      %s84 = sphi 0, %s70
      %s90 = sphi 0, %s92
      %s93 = sphi 0, %s90
      %s94 = sphi 0, %s93
      %s110 = sphi 0, %s94
    $region4: #{tpu_custom_call.1} parent=1 // loop_header_branch
      %15 = sbr.rel (%p13) target = $region8
    $region5: #{tpu_custom_call.1} parent=1 // loop_body
      %s17 = ssub.s32 %s12, 1
      %s18 = ssub.s32 %s12, 2
      %s19 = sadd.s32 %s12, 1
      %s20 = ssub.s32 %s12, %s19
      %p21 = scmp.eq.s32.totalorder %s20, 0
      %s23 = sadd.s32 %s22, 1
      %s24 = scalar_select %p21, %s22, %s23
      %p27 = pneg %p21
      %p28 = scmp.eq.s32.totalorder %s12, 3
      %p29 = por %p27, %p28
      %p30 = scmp.ne.s32.totalorder %s22, %s25
      %p31 = scmp.eq.s32.totalorder %s12, 0
      %p32 = por %p30, %p31
      %p33 = scmp.ne.s32.totalorder %s22, %s25
      %p34 = scmp.eq.s32.totalorder %s17, 3
      %p35 = por %p33, %p34
      %p36 = scmp.ne.s32.totalorder %s25, %s26
      %p37 = scmp.eq.s32.totalorder %s17, 0
      %p38 = por %p36, %p37
      %p39 = scmp.ne.s32.totalorder %s25, %s26
      %p40 = scmp.eq.s32.totalorder %s18, 3
      %p41 = por %p39, %p40
      %p43 = scmp.ne.s32.totalorder %s26, %s42
      %p44 = scmp.eq.s32.totalorder %s18, 0
      %p45 = por %p43, %p44
      %s47 = sadd.s32 %s46, 1
      %p50 = scmp.eq.s32.totalorder %s12, 3
      %p51 = scmp.ne.s32.totalorder %s46, %s48
      %p52 = scmp.eq.s32.totalorder %s12, 0
      %p53 = por %p51, %p52
      %p54 = scmp.ne.s32.totalorder %s46, %s48
      %p55 = scmp.eq.s32.totalorder %s17, 3
      %p56 = por %p54, %p55
      %p57 = scmp.ne.s32.totalorder %s48, %s49
      %p58 = scmp.eq.s32.totalorder %s17, 0
      %p59 = por %p57, %p58
      %p60 = scmp.ne.s32.totalorder %s48, %s49
      %p61 = scmp.eq.s32.totalorder %s18, 3
      %p62 = por %p60, %p61
      %p64 = scmp.ne.s32.totalorder %s49, %s63
      %p65 = scmp.eq.s32.totalorder %s18, 0
      %p66 = por %p64, %p65
      %s68 = sadd.s32 %s67, 1
      %p71 = scmp.eq.s32.totalorder %s12, 3
      %p72 = scmp.ne.s32.totalorder %s67, %s69
      %p73 = scmp.eq.s32.totalorder %s12, 0
      %p74 = por %p72, %p73
      %p75 = scmp.ne.s32.totalorder %s67, %s69
      %p76 = scmp.eq.s32.totalorder %s17, 3
      %p77 = por %p75, %p76
      %p78 = scmp.ne.s32.totalorder %s69, %s70
      %p79 = scmp.eq.s32.totalorder %s17, 0
      %p80 = por %p78, %p79
      %p81 = scmp.ne.s32.totalorder %s69, %s70
      %p82 = scmp.eq.s32.totalorder %s18, 3
      %p83 = por %p81, %p82
      %p85 = scmp.ne.s32.totalorder %s70, %s84
      %p86 = scmp.eq.s32.totalorder %s18, 0
      %p87 = por %p85, %p86
      %s88 = ssub.s32 %s12, %s19
      %p89 = scmp.eq.s32.totalorder %s88, 0
      %s91 = sadd.s32 %s90, 1
      %s92 = scalar_select %p89, %s90, %s91
      %p95 = pneg %p89
      %p96 = scmp.eq.s32.totalorder %s12, 3
      %p97 = por %p95, %p96
      %p98 = scmp.ne.s32.totalorder %s90, %s93
      %p99 = scmp.eq.s32.totalorder %s12, 0
      %p100 = por %p98, %p99
      %p101 = scmp.ne.s32.totalorder %s90, %s93
      %p102 = scmp.eq.s32.totalorder %s17, 3
      %p103 = por %p101, %p102
      %p104 = scmp.ne.s32.totalorder %s93, %s94
      %p105 = scmp.eq.s32.totalorder %s17, 0
      %p106 = por %p104, %p105
      %p107 = scmp.ne.s32.totalorder %s93, %s94
      %p108 = scmp.eq.s32.totalorder %s18, 3
      %p109 = por %p107, %p108
      %p111 = scmp.ne.s32.totalorder %s94, %s110
      %p112 = scmp.eq.s32.totalorder %s18, 0
      %p113 = por %p111, %p112
      %p114 = scmp.le.s32.totalorder 1, %s12
      %p115 = scmp.lt.s32.totalorder %s12, 5
      %p116 = pnand %p114, %p115
      %p117 = pneg %p116
      // Predicated region
      $region9: #{tpu_custom_call.1} parent=5 // pred_check
        _
      $region10: #{tpu_custom_call.1} parent=5 // pred_check_branch
        %119 = sbr.rel (%p116) target = $region12
      $region11: #{tpu_custom_call.1} parent=5 // pred_region
        %s120 = ssub.s32 %s12, 1
        // Predicated region
        $region13: #{tpu_custom_call.1} parent=11 // pred_check
          %p121 = pneg %p59
        $region14: #{tpu_custom_call.1} parent=11 // pred_check_branch
          %123 = sbr.rel (%p121) target = $region16
        $region15: #{tpu_custom_call.1} parent=11 // pred_region
          _
        $region16: #{tpu_custom_call.1} parent=11 // pred_fallthru
          _
        // Predicated region
        $region17: #{tpu_custom_call.1} parent=11 // pred_check
          %p124 = pneg %p80
        $region18: #{tpu_custom_call.1} parent=11 // pred_check_branch
          %126 = sbr.rel (%p124) target = $region20
        $region19: #{tpu_custom_call.1} parent=11 // pred_region
          _
        $region20: #{tpu_custom_call.1} parent=11 // pred_fallthru
          _
      $region12: #{tpu_custom_call.1} parent=5 // pred_fallthru
        _
      %p127 = scmp.lt.s32.totalorder %s12, 4
      // Predicated region
      $region21: #{tpu_custom_call.1} parent=5 // pred_check
        %p128 = pneg %p127
      $region22: #{tpu_custom_call.1} parent=5 // pred_check_branch
        %130 = sbr.rel (%p128) target = $region24
      $region23: #{tpu_custom_call.1} parent=5 // pred_region
        // Predicated region
        $region25: #{tpu_custom_call.1} parent=23 // pred_check
          %p131 = pneg %p32
        $region26: #{tpu_custom_call.1} parent=23 // pred_check_branch
          %133 = sbr.rel (%p131) target = $region28
        $region27: #{tpu_custom_call.1} parent=23 // pred_region
          %s134 = smul.u32 2, %s12
          %s135 = ssub.s32 7, %s134
          %p136 = scmp.lt.s32.totalorder %s135, 2
          %s137 = scalar_select %p136, %s135, 2
          %s138 = smul.u32 128, %s137
          %p139 = scmp.lt.s32.totalorder %s134, 6
          %s140 = scalar_select %p139, %s134, 6
          %s141 = smul.addr %s140, 8
          %s142 = scalar_lea.vmem %s0, %s141
          %s143 = smul.u32 2, %s12
          %s144 = ssub.s32 7, %s143
          %p145 = scmp.lt.s32.totalorder %s144, 2
          %s146 = scalar_select %p145, %s144, 2
          %s147 = smul.u32 128, %s146
        $region28: #{tpu_custom_call.1} parent=23 // pred_fallthru
          _
      $region24: #{tpu_custom_call.1} parent=5 // pred_fallthru
        _
      %p148 = scmp.le.s32.totalorder 1, %s12
      %p149 = scmp.lt.s32.totalorder %s12, 5
      %p150 = pnand %p148, %p149
      %p151 = pneg %p150
      // Predicated region
      $region29: #{tpu_custom_call.1} parent=5 // pred_check
        _
      $region30: #{tpu_custom_call.1} parent=5 // pred_check_branch
        %153 = sbr.rel (%p150) target = $region32
      $region31: #{tpu_custom_call.1} parent=5 // pred_region
        %s154 = ssub.s32 %s12, 1
        %s155 = smul.u32 2, %s17
        %s156 = ssub.s32 7, %s155
        %p157 = scmp.lt.s32.totalorder %s156, 2
        %s158 = scalar_select %p157, %s156, 2
        %s159 = smul.u32 128, %s158
        %p160 = scmp.lt.s32.totalorder %s155, 6
        %s161 = scalar_select %p160, %s155, 6
        %s162 = smul.addr %s161, 8
        %s163 = scalar_lea.vmem %s0, %s162
        %p164 = pneg %p38
        %p165 = pneg %p35
        %p166 = pneg %p59
        %p167 = pneg %p56
        %p168 = pneg %p80
        %p169 = pneg %p77
        %p170 = pneg %p106
        %p171 = pneg %p103
        %s172 = sand.u32 %s93, 1
        %s173 = scalar_lea.sflag [#allocation3], %s172
        %s174 = sand.u32 %s93, 1
        %s175 = smul.addr %s174, 16
        %s176 = scalar_lea.vmem [#allocation2], %s175
        %s177 = smul.u32 2, %s17
        %s178 = ssub.s32 7, %s177
        %p179 = scmp.lt.s32.totalorder %s178, 2
        %s180 = scalar_select %p179, %s178, 2
        %s181 = smul.u32 128, %s180
        %p182 = scmp.lt.s32.totalorder %s177, 6
        %s183 = scalar_select %p182, %s177, 6
        %s184 = smul.addr %s183, 8
        %s185 = scalar_lea.vmem %s0, %s184
        %s186 = smul.u32 2, %s17
        %s187 = ssub.s32 7, %s186
        %p188 = scmp.lt.s32.totalorder %s187, 2
        %s189 = scalar_select %p188, %s187, 2
        %s190 = smul.u32 128, %s189
        %s191 = smul.u32 2, %s17
        %s192 = ssub.s32 7, %s191
        %p193 = scmp.lt.s32.totalorder %s192, 2
        %s194 = scalar_select %p193, %s192, 2
        %s195 = smul.u32 128, %s194
        %v196 = vld [vmem:[%s185] sm:$0xff]
        %v197 = vld [vmem:[%s185 + $0x8] sm:$0xff]
        %v198 = vld [vmem:[%s1] sm:$0xff]
        %v199 = vld [vmem:[%s2] sm:$0x1]
        %v201 = vlaneseq
        %v202 = vshrl.u32 %v201, 7
        %v203 = vsub.s32 0, %v202
        %v204 = vrot.slane %v199, %v203
        %vm206 = vcmask 64512
        %v208 = vsel %vm206, %v196, 0
        %v211 = vsel %vm206, %v197, 0
        %213 = vmatprep.subr.mxu0 0.0
        %214 = vmatpush1.msra.mxu0 %v198
        %215 = vmatprep.subr.mxu0 0.0
        %216 = vmatpush1.msra.mxu0 0.0
        %217 = vmatprep.subr.mxu0 0.0
        %218 = vmatpush1.msra.mxu0 0.0
        %219 = vmatprep.subr.mxu0 0.0
        %220 = vmatpush1.msra.mxu0 0.0
        %221 = vmatprep.subr.mxu0 0.0
        %222 = vmatpush1.msra.mxu0 0.0
        %223 = vmatprep.subr.mxu0 0.0
        %224 = vmatpush1.msra.mxu0 0.0
        %225 = vmatprep.subr.mxu0 0.0
        %226 = vmatpush1.msra.mxu0 0.0
        %227 = vmatprep.subr.mxu0 0.0
        %228 = vmatpush1.msra.mxu0 0.0
        %229 = vmatprep.subr.mxu0 0.0
        %230 = vmatpush1.msra.mxu0 0.0
        %231 = vmatprep.subr.mxu0 0.0
        %232 = vmatpush1.msra.mxu0 0.0
        %233 = vmatprep.subr.mxu0 0.0
        %234 = vmatpush1.msra.mxu0 0.0
        %235 = vmatprep.subr.mxu0 0.0
        %236 = vmatpush1.msra.mxu0 0.0
        %237 = vmatprep.subr.mxu0 0.0
        %238 = vmatpush1.msra.mxu0 0.0
        %239 = vmatprep.subr.mxu0 0.0
        %240 = vmatpush1.msra.mxu0 0.0
        %241 = vmatprep.subr.mxu0 0.0
        %242 = vmatpush1.msra.mxu0 0.0
        %243 = vmatprep.subr.mxu0 0.0
        %244 = vmatpush1.msra.mxu0 0.0
        %245 = vmatprep.subr.mxu0 0.0
        %246 = vmatpush1.msra.mxu0 0.0
        %247 = vmatprep.subr.mxu0 0.0
        %248 = vmatpush1.msra.mxu0 0.0
        %249 = vmatprep.subr.mxu0 0.0
        %250 = vmatpush1.msra.mxu0 0.0
        %251 = vmatprep.subr.mxu0 0.0
        %252 = vmatpush1.msra.mxu0 0.0
        %253 = vmatprep.subr.mxu0 0.0
        %254 = vmatpush1.msra.mxu0 0.0
        %255 = vmatprep.subr.mxu0 0.0
        %256 = vmatpush1.msra.mxu0 0.0
        %257 = vmatprep.subr.mxu0 0.0
        %258 = vmatpush1.msra.mxu0 0.0
        %259 = vmatprep.subr.mxu0 0.0
        %260 = vmatpush1.msra.mxu0 0.0
        %261 = vmatprep.subr.mxu0 0.0
        %262 = vmatpush1.msra.mxu0 0.0
        %263 = vmatprep.subr.mxu0 0.0
        %264 = vmatpush1.msra.mxu0 0.0
        %265 = vmatprep.subr.mxu0 0.0
        %266 = vmatpush1.msra.mxu0 0.0
        %267 = vmatprep.subr.mxu0 0.0
        %268 = vmatpush1.msra.mxu0 0.0
        %269 = vmatprep.subr.mxu0 0.0
        %270 = vmatpush1.msra.mxu0 0.0
        %271 = vmatprep.subr.mxu0 0.0
        %272 = vmatpush1.msra.mxu0 0.0
        %273 = vmatprep.subr.mxu0 0.0
        %274 = vmatpush1.msra.mxu0 0.0
        %275 = vmatprep.subr.mxu0 0.0
        %276 = vmatpush1.msra.mxu0 0.0
        %277 = vmatprep.mubr.f32.mxu0 0.0
        %278 = vmatmul.mubr.f32.gmra.mrb[0].mxu0 %v208
        %v279 = vpop.f32.mrb[0].mxu0
        %v280 = vadd.f32 %v204, %v279
        %v281 = vpop.f32.mrb[0].mxu0
        %282 = vmatprep.mubr.f32.mxu0 0.0
        %283 = vmatmul.mubr.f32.gmra.mrb[0].mxu0 %v211
        %v284 = vpop.f32.mrb[0].mxu0
        %v285 = vadd.f32 %v204, %v284
        %v286 = vpop.f32.mrb[0].mxu0
        %287 = vdwg.mxu0
        %v288 = vmul.f32 %v280, 30.0
        %v289 = vmul.f32 %v285, 30.0
        %v290 = vand.u32 2147483647, %v288
        %vm291 = vcmp.le.f32.partialorder %v290, 0.7853982
        %vm292 = vcmp.lt.s32.totalorder %v288, 0
        %v293 = vand.u32 %v288, 2139095040
        %v294 = vshrl.u32 %v293, 23
        %v295 = vsub.s32 %v294, 127
        %v296 = vand.u32 2147483647, %v288
        %v297 = vand.u32 %v296, 8388607
        %v298 = vor.u32 %v297, 8388608
        %v299 = vsub.s32 0, %v298
        %v300 = vadd.s32 %v295, 1
        %vm301 = vcmp.gt.s32.totalorder %v300, 0
        %v302 = vsel %vm301, %v300, 0
        %v303 = vshrl.u32 %v302, 5
        %v304 = vand.u32 %v302, 31
        %v305 = vsub.s32 32, %v304
        %v306 = vshrl.u32 683565275, %v305
        %v307 = vshll.u32 683565275, %v304
        %v308 = vshrl.u32 2475754826, %v305
        %v309 = vor.u32 %v307, %v308
        %v310 = vshll.u32 2475754826, %v304
        %v311 = vshrl.u32 2131351028, %v305
        %v312 = vor.u32 %v310, %v311
        %v313 = vshll.u32 2131351028, %v304
        %v314 = vshrl.u32 2102212464, %v305
        %v315 = vor.u32 %v313, %v314
        %v316 = vshll.u32 2102212464, %v304
        %v317 = vshrl.u32 920167782, %v305
        %v318 = vor.u32 %v316, %v317
        %v319 = vshll.u32 920167782, %v304
        %v320 = vshrl.u32 1326507024, %v305
        %v321 = vor.u32 %v319, %v320
        %vm322 = vcmp.lt.s32.totalorder %v303, 1
        %vm323 = vcmp.lt.s32.totalorder %v303, 2
        %vm324 = vcmp.lt.s32.totalorder %v303, 3
        %vm325 = vcmp.lt.s32.totalorder %v303, 4
        %v326 = vsel %vm322, %v306, %v309
        %v327 = vsel %vm325, %v315, 2102212464
        %v328 = vsel %vm324, %v312, %v327
        %v329 = vsel %vm323, %v326, %v328
        %v330 = vsel %vm322, %v309, %v312
        %v331 = vsel %vm325, %v318, 920167782
        %v332 = vsel %vm324, %v315, %v331
        %v333 = vsel %vm323, %v330, %v332
        %v334 = vsel %vm322, %v312, %v315
        %v335 = vsel %vm325, %v321, 1326507024
        %v336 = vsel %vm324, %v318, %v335
        %v337 = vsel %vm323, %v334, %v336
        %v338 = vshll.u32 %v298, 8
        %v339 = vmul.u32.u64.compose %v338, %v337
        %v340 = vextract.low.u32 %v339
        %v341 = vextract.high.u32 %v339
        %v342 = vmul.u32.u64.compose %v338, %v333
        %v343 = vextract.low.u32 %v342
        %v344 = vextract.high.u32 %v342
        %v345 = vmul.u32 %v338, %v329
        %v346 = vadd.s32 %v341, %v343
        %vm347 = vc.u32 %v341, %v343
        %v348 = vadd.s32 %v344, 1
        %v349 = vsel %vm347, %v348, %v344
        %v350 = vadd.s32 %v345, %v349
        %v351 = vadd.s32 %v350, 536870912
        %v352 = vshrl.u32 %v351, 30
        %v353 = vshll.u32 %v352, 30
        %v354 = vsub.s32 %v350, %v353
        %vm355 = vcmp.lt.s32.totalorder %v354, 0
        %v356 = vsub.s32 0, %v354
        %v357 = vsel %vm355, %v356, %v354
        %v358 = vclz %v357
        %v359 = vsub.s32 %v358, 2
        %vm360 = vcmp.gt.s32.totalorder 0, %v359
        %v361 = vsel %vm360, 0, %v359
        %v362 = vsub.s32 32, %v361
        %v363 = vshll.u32 %v354, %v361
        %v364 = vshrl.u32 %v346, %v362
        %v365 = vor.u32 %v363, %v364
        %v366 = vsub.s32 4294967266, %v361
        %v367 = vadd.s32 %v366, 127
        %v368 = vshll.u32 %v367, 23
        %v369 = vor.u32 4788187, %v368
        %v370 = vand.u32 2147483647, %v369
        %v372 = vcvt.s32.f32 %v365
        %v373 = vmul.f32 %v372, %v370
        %v374 = vxor.u32 %v373, 2147483648
        %v375 = vsel %vm292, %v374, %v373
        %v376 = vsub.s32 4, %v352
        %v377 = vsel %vm292, %v376, %v352
        %v378 = vsel %vm291, %v288, %v375
        %v379 = vsel %vm291, 0, %v377
        %v380 = vcosq.f32.pop %v378
        %v381 = vsinq.f32.pop %v378
        %vm382 = vweird.f32 %v288
        %v383 = vadd.s32 %v379, 3
        %v384 = vand.u32 %v383, 3
        %vm385 = vcmp.lt.s32.totalorder %v384, 2
        %vm386 = vcmp.eq.s32.totalorder %v384, 0
        %v387 = vxor.u32 %v381, 2147483648
        %v388 = vsel %vm386, %v380, %v387
        %vm389 = vcmp.eq.s32.totalorder %v384, 2
        %v390 = vxor.u32 %v380, 2147483648
        %v391 = vsel %vm389, %v390, %v381
        %v392 = vsel %vm385, %v388, %v391
        %v393 = vsel %vm382, nan, %v392
        %v394 = vand.u32 2147483647, %v289
        %vm395 = vcmp.le.f32.partialorder %v394, 0.7853982
        %vm396 = vcmp.lt.s32.totalorder %v289, 0
        %v397 = vand.u32 %v289, 2139095040
        %v398 = vshrl.u32 %v397, 23
        %v399 = vsub.s32 %v398, 127
        %v400 = vand.u32 2147483647, %v289
        %v401 = vand.u32 %v400, 8388607
        %v402 = vor.u32 %v401, 8388608
        %v403 = vsub.s32 0, %v402
        %v404 = vadd.s32 %v399, 1
        %vm405 = vcmp.gt.s32.totalorder %v404, 0
        %v406 = vsel %vm405, %v404, 0
        %v407 = vshrl.u32 %v406, 5
        %v408 = vand.u32 %v406, 31
        %v409 = vsub.s32 32, %v408
        %v410 = vshrl.u32 683565275, %v409
        %v411 = vshll.u32 683565275, %v408
        %v412 = vshrl.u32 2475754826, %v409
        %v413 = vor.u32 %v411, %v412
        %v414 = vshll.u32 2475754826, %v408
        %v415 = vshrl.u32 2131351028, %v409
        %v416 = vor.u32 %v414, %v415
        %v417 = vshll.u32 2131351028, %v408
        %v418 = vshrl.u32 2102212464, %v409
        %v419 = vor.u32 %v417, %v418
        %v420 = vshll.u32 2102212464, %v408
        %v421 = vshrl.u32 920167782, %v409
        %v422 = vor.u32 %v420, %v421
        %v423 = vshll.u32 920167782, %v408
        %v424 = vshrl.u32 1326507024, %v409
        %v425 = vor.u32 %v423, %v424
        %vm426 = vcmp.lt.s32.totalorder %v407, 1
        %vm427 = vcmp.lt.s32.totalorder %v407, 2
        %vm428 = vcmp.lt.s32.totalorder %v407, 3
        %vm429 = vcmp.lt.s32.totalorder %v407, 4
        %v430 = vsel %vm426, %v410, %v413
        %v431 = vsel %vm429, %v419, 2102212464
        %v432 = vsel %vm428, %v416, %v431
        %v433 = vsel %vm427, %v430, %v432
        %v434 = vsel %vm426, %v413, %v416
        %v435 = vsel %vm429, %v422, 920167782
        %v436 = vsel %vm428, %v419, %v435
        %v437 = vsel %vm427, %v434, %v436
        %v438 = vsel %vm426, %v416, %v419
        %v439 = vsel %vm429, %v425, 1326507024
        %v440 = vsel %vm428, %v422, %v439
        %v441 = vsel %vm427, %v438, %v440
        %v442 = vshll.u32 %v402, 8
        %v443 = vmul.u32.u64.compose %v442, %v441
        %v444 = vextract.low.u32 %v443
        %v445 = vextract.high.u32 %v443
        %v446 = vmul.u32.u64.compose %v442, %v437
        %v447 = vextract.low.u32 %v446
        %v448 = vextract.high.u32 %v446
        %v449 = vmul.u32 %v442, %v433
        %v450 = vadd.s32 %v445, %v447
        %vm451 = vc.u32 %v445, %v447
        %v452 = vadd.s32 %v448, 1
        %v453 = vsel %vm451, %v452, %v448
        %v454 = vadd.s32 %v449, %v453
        %v455 = vadd.s32 %v454, 536870912
        %v456 = vshrl.u32 %v455, 30
        %v457 = vshll.u32 %v456, 30
        %v458 = vsub.s32 %v454, %v457
        %vm459 = vcmp.lt.s32.totalorder %v458, 0
        %v460 = vsub.s32 0, %v458
        %v461 = vsel %vm459, %v460, %v458
        %v462 = vclz %v461
        %v463 = vsub.s32 %v462, 2
        %vm464 = vcmp.gt.s32.totalorder 0, %v463
        %v465 = vsel %vm464, 0, %v463
        %v466 = vsub.s32 32, %v465
        %v467 = vshll.u32 %v458, %v465
        %v468 = vshrl.u32 %v450, %v466
        %v469 = vor.u32 %v467, %v468
        %v470 = vsub.s32 4294967266, %v465
        %v471 = vadd.s32 %v470, 127
        %v472 = vshll.u32 %v471, 23
        %v473 = vor.u32 4788187, %v472
        %v474 = vand.u32 2147483647, %v473
        %v476 = vcvt.s32.f32 %v469
        %v477 = vmul.f32 %v476, %v474
        %v478 = vxor.u32 %v477, 2147483648
        %v479 = vsel %vm396, %v478, %v477
        %v480 = vsub.s32 4, %v456
        %v481 = vsel %vm396, %v480, %v456
        %v482 = vsel %vm395, %v289, %v479
        %v483 = vsel %vm395, 0, %v481
        %v484 = vcosq.f32.pop %v482
        %v485 = vsinq.f32.pop %v482
        %vm486 = vweird.f32 %v289
        %v487 = vadd.s32 %v483, 3
        %v488 = vand.u32 %v487, 3
        %vm489 = vcmp.lt.s32.totalorder %v488, 2
        %vm490 = vcmp.eq.s32.totalorder %v488, 0
        %v491 = vxor.u32 %v485, 2147483648
        %v492 = vsel %vm490, %v484, %v491
        %vm493 = vcmp.eq.s32.totalorder %v488, 2
        %v494 = vxor.u32 %v484, 2147483648
        %v495 = vsel %vm493, %v494, %v485
        %v496 = vsel %vm489, %v492, %v495
        %v497 = vsel %vm486, nan, %v496
        %498 = vst [vmem:[%s176] sm:$0xff] %v393
        %499 = vst [vmem:[%s176 + $0x8] sm:$0xff] %v497
        %s500 = sand.u32 %s93, 1
        %s501 = scalar_lea.sflag [#allocation3], %s500
        %s502 = sand.u32 %s93, 1
        %s503 = smul.addr %s502, 16
        %s504 = scalar_lea.vmem [#allocation2], %s503
        // Predicated region
        $region33: #{tpu_custom_call.1} parent=31 // pred_check
          %p505 = pneg %p103
        $region34: #{tpu_custom_call.1} parent=31 // pred_check_branch
          %507 = sbr.rel (%p505) target = $region36
        $region35: #{tpu_custom_call.1} parent=31 // pred_region
          %s508 = smul.u32 2, %s17
          %s509 = ssub.s32 7, %s508
          %p510 = scmp.lt.s32.totalorder %s509, 2
          %s511 = scalar_select %p510, %s509, 2
          %s512 = smul.u32 128, %s511
          %s514 = ssub.s32 256, %s512
          %515 = vsyncadd %s501, %s514
          %p516 = scmp.ne.s32.totalorder 0, %s512
          %s517 = smul.addr %s508, 128
          %s518 = scalar_lea.hbm %s3, %s517
          %s519 = smul.u32 8, %s511
          %s520 = sshll.u32 %s504, 4
          %s521 = int_to_ptr.vmem [resolvable:$true] %s520
          %s522 = sshll.u32 %s519, 4
          %526 = dma.vmem_to_hbm [thread:$0]  (%p516), %s521, %s522, %s518, %s501, 128, 128, 8
        $region36: #{tpu_custom_call.1} parent=31 // pred_fallthru
          _
      $region32: #{tpu_custom_call.1} parent=5 // pred_fallthru
        _
      %p527 = scmp.le.s32.totalorder 2, %s12
      // Predicated region
      $region37: #{tpu_custom_call.1} parent=5 // pred_check
        %p528 = pneg %p527
      $region38: #{tpu_custom_call.1} parent=5 // pred_check_branch
        %530 = sbr.rel (%p528) target = $region40
      $region39: #{tpu_custom_call.1} parent=5 // pred_region
        %s531 = ssub.s32 %s12, 2
        // Predicated region
        $region41: #{tpu_custom_call.1} parent=39 // pred_check
          %p532 = pneg %p109
        $region42: #{tpu_custom_call.1} parent=39 // pred_check_branch
          %534 = sbr.rel (%p532) target = $region44
        $region43: #{tpu_custom_call.1} parent=39 // pred_region
          %s535 = sand.u32 %s94, 1
          %s536 = scalar_lea.sflag [#allocation3], %s535
          %s537 = sand.u32 %s94, 1
          %s538 = smul.addr %s537, 16
          %s539 = scalar_lea.vmem [#allocation2], %s538
          %540 = dma.done %s536, 256
        $region44: #{tpu_custom_call.1} parent=39 // pred_fallthru
          _
      $region40: #{tpu_custom_call.1} parent=5 // pred_fallthru
        _
    $region6: #{tpu_custom_call.1} parent=1 // loop_footer
      %s16 = sadd.s32 1, %s12
    $region7: #{tpu_custom_call.1} parent=1 // loop_footer_branch
      %11 = sbr.rel target = $region3
    $region8: #{tpu_custom_call.1} parent=1 // loop_exit
      _
    %541 = vsyncpa [#allocation3], 1
    %s542 = scalar_lea.sflag [#allocation3], 1
    %543 = vsyncpa %s542, 1

</llo_original>
